<compile_context>
chip_gen: v6e
topology: v6e:2x2x1
jax: 0.10.0
libtpu: 0.0.40
codegen_flags: <defaults>
</compile_context>

<pallas_src>
import functools

import jax
import jax.numpy as jnp
from jax.experimental import pallas as pl
from jax.experimental.pallas import tpu as pltpu

HIDDEN = 128
N_LABEL = 3
N_AUTH = 2
HEAD_ROWS = 8            # 3 + 2 head outputs, zero-padded to one sublane group


def _mlp_kernel(x_ref, w1_ref, b1_ref, wht_ref, bht_ref, out_ref):
    # fc1 on the MXU with f32 accumulation; bias + ReLU on the VPU.
    h = jnp.dot(x_ref[...], w1_ref[...], preferred_element_type=jnp.float32)
    h = jnp.maximum(h + b1_ref[...], 0.0)
    # Dropout(p=0.5) is identity at inference time (module.eval() semantics).
    # TODO(synk): training-mode dropout would need pltpu.prng_seed/prng_random_bits masking.
    h = h.astype(wht_ref.dtype)

    # Fused transposed heads: [8, HIDDEN] @ [tile_b, HIDDEN]^T -> [8, tile_b].
    # Sublane-padded (5 real rows of 8), lane dim = tile_b -> lane-dense unmasked stores
    # and only 8 rows of f32 writeback instead of a 128-lane-padded slab.
    out_t = jax.lax.dot_general(
        wht_ref[...], h,
        dimension_numbers=(((1,), (1,)), ((), ())),
        preferred_element_type=jnp.float32)
    out_ref[...] = (out_t + bht_ref[...]).astype(out_ref.dtype)


def _fuse_head_params(params):
    """Concatenate + transpose the two head weights/biases, zero-pad rows 5..7."""
    wh = jnp.concatenate([params["w_label"], params["w_auth"]], axis=1)   # [HIDDEN, 5]
    bh = jnp.concatenate([params["b_label"], params["b_auth"]], axis=1)   # [1, 5]
    pad = HEAD_ROWS - (N_LABEL + N_AUTH)
    wh_t = jnp.pad(wh.T, ((0, pad), (0, 0)))    # [8, HIDDEN]; padded rows -> exact-zero logits
    bh_t = jnp.pad(bh.T, ((0, pad), (0, 0)))    # [8, 1]
    return wh_t, bh_t


def _choose_tile_b(B, D, itemsize):
    """Batch tile: as large as the VMEM budget allows (amortize ~0.35us/step grid overhead),
    a multiple of 128 so the [8, tile_b] output stores stay lane-dense, and >=2 grid steps
    when the batch is big enough so v7x's two TensorCores can split the 'parallel' axis."""
    if B <= 128:
        return B
    # Conservative budget under v7x's 32 MiB scoped-VMEM default (we also set
    # vmem_limit_bytes=32 MiB so v5e's 16 MiB default isn't the limiter).
    weight_bytes = 2 * (D * HIDDEN * itemsize + HIDDEN * 4
                        + HEAD_ROWS * HIDDEN * itemsize + HEAD_ROWS * 4)
    budget = max((24 << 20) - weight_bytes, 1 << 20)
    per_row = (2 * D * itemsize            # double-buffered x block
               + 2 * HEAD_ROWS * 4         # double-buffered [8, tile_b] f32 output block
               + HIDDEN * (4 + itemsize))  # f32 fc1 accumulator + compute-dtype copy
    budget_tile = max(budget // per_row, 1)
    if budget_tile >= B:
        if B >= 256:
            # Split into >=2 lane-dense tiles so v7x megacore shards the batch.
            return ((pl.cdiv(B, 2) + 127) // 128) * 128
        return B
    tile = min(budget_tile, 4096)
    return max((tile // 128) * 128, 128)


@functools.partial(jax.jit, static_argnames=("compute_dtype",))
def multi_class_forward(x, params, *, compute_dtype=jnp.bfloat16):
    """x: [B, D]. params: dict from init_params. Returns (label_logits[B,3], auth_logits[B,2]).

    compute_dtype=bfloat16 (default, all TPU generations) halves HBM read traffic for x/w1;
    accumulation stays f32 inside the kernel.  Use compute_dtype=float32 for exact results.
    """
    B, D = x.shape
    itemsize = jnp.dtype(compute_dtype).itemsize
    tile_b = _choose_tile_b(B, D, itemsize)
    num_tiles = pl.cdiv(B, tile_b)

    x_c = x.astype(compute_dtype)
    w1 = params["w1"].astype(compute_dtype)
    b1 = params["b1"].astype(jnp.float32)
    wh_t, bh_t = _fuse_head_params(params)
    wh_t = wh_t.astype(compute_dtype)
    bh_t = bh_t.astype(jnp.float32)

    cost = pl.CostEstimate(
        flops=2 * B * D * HIDDEN + 2 * B * HIDDEN * HEAD_ROWS,
        transcendentals=0,
        bytes_accessed=(B * D + D * HIDDEN + HEAD_ROWS * HIDDEN) * itemsize
        + (HIDDEN + HEAD_ROWS) * 4          # biases (f32)
        + HEAD_ROWS * B * 4,                # transposed output writeback (f32, only 8 rows)
    )

    out_t = pl.pallas_call(
        _mlp_kernel,
        # f32 output is fine here: the transposed layout already cut writeback 16x.
        out_shape=jax.ShapeDtypeStruct((HEAD_ROWS, B), jnp.float32),
        grid=(num_tiles,),
        in_specs=[
            pl.BlockSpec((tile_b, D), lambda i: (i, 0)),        # x: blocked over batch
            pl.BlockSpec((D, HIDDEN), lambda i: (0, 0)),        # weights/biases: VMEM-resident
            pl.BlockSpec((1, HIDDEN), lambda i: (0, 0)),
            pl.BlockSpec((HEAD_ROWS, HIDDEN), lambda i: (0, 0)),
            pl.BlockSpec((HEAD_ROWS, 1), lambda i: (0, 0)),
        ],
        out_specs=pl.BlockSpec((HEAD_ROWS, tile_b), lambda i: (0, i)),
        compiler_params=pltpu.CompilerParams(
            dimension_semantics=("parallel",),    # batch axis shards across v7x's 2 TCs
            vmem_limit_bytes=32 * 1024 * 1024,    # covers v5e's 16 MiB scoped default
        ),
        cost_estimate=cost,
    )(x_c, w1, b1, wh_t, bh_t)

    # Only an [8, B] slab comes back; slicing + transposing it is negligible and fuses
    # into whatever consumes the logits.
    label_logits = out_t[:N_LABEL, :].T
    auth_logits = out_t[N_LABEL:N_LABEL + N_AUTH, :].T
    return label_logits, auth_logits


def init_params(key, input_dim):
    """Deterministic init mimicking torch.nn.Linear (uniform +/- 1/sqrt(fan_in))."""
    k1, k2, k3, k4, k5, k6 = jax.random.split(key, 6)

    def linear(kw, kb, fan_in, fan_out):
        bound = 1.0 / jnp.sqrt(fan_in)
        w = jax.random.uniform(kw, (fan_in, fan_out), jnp.float32, -bound, bound)
        b = jax.random.uniform(kb, (1, fan_out), jnp.float32, -bound, bound)
        return w, b

    w1, b1 = linear(k1, k2, input_dim, HIDDEN)
    wl, bl = linear(k3, k4, HIDDEN, N_LABEL)
    wa, ba = linear(k5, k6, HIDDEN, N_AUTH)
    return {"w1": w1, "b1": b1,
            "w_label": wl, "b_label": bl,
            "w_auth": wa, "b_auth": ba}


def _reference(x, params):
    h = jnp.maximum(x @ params["w1"] + params["b1"], 0.0)
    return (h @ params["w_label"] + params["b_label"],
            h @ params["w_auth"] + params["b_auth"])


if __name__ == "__main__":
    key = jax.random.PRNGKey(0)
    kx, kp = jax.random.split(key)

    batch, input_dim = 8, 32
    x = jax.random.normal(kx, (batch, input_dim), jnp.float32)
    params = init_params(kp, input_dim)

    ref_label, ref_auth = _reference(x, params)

    # Exact check on the f32 path.
    l32, a32 = jax.block_until_ready(
        multi_class_forward(x, params, compute_dtype=jnp.float32))
    assert l32.shape == (batch, N_LABEL) and a32.shape == (batch, N_AUTH)
    assert jnp.allclose(l32, ref_label, atol=1e-5)
    assert jnp.allclose(a32, ref_auth, atol=1e-5)

    # Default bf16 path (half the HBM read traffic): relaxed tolerance by design.
    l16, a16 = jax.block_until_ready(multi_class_forward(x, params))
    assert l16.shape == (batch, N_LABEL) and a16.shape == (batch, N_AUTH)
    assert jnp.allclose(l16, ref_label, atol=5e-2, rtol=5e-2)
    assert jnp.allclose(a16, ref_auth, atol=5e-2, rtol=5e-2)

    print("KERNEL_OK")
</pallas_src>

<mosaic_0001>
module attributes {stable_mosaic.version = 11 : i64} {
  func.func @_mlp_kernel(%arg0: i32, %arg1: memref<8x32xf32, #tpu.memory_space<vmem>>, %arg2: memref<32x128xf32, #tpu.memory_space<vmem>>, %arg3: memref<1x128xf32, #tpu.memory_space<vmem>>, %arg4: memref<8x128xf32, #tpu.memory_space<vmem>>, %arg5: memref<8x1xf32, #tpu.memory_space<vmem>>, %arg6: memref<8x8xf32, #tpu.memory_space<vmem>>) attributes {dimension_semantics = [#tpu.dimension_semantics<parallel>], iteration_bounds = array<i64: 1>, scalar_prefetch = 0 : i64, scratch_operands = 0 : i64, tpu.core_type = #tpu.core_type<tc>, window_params = [{transform_indices = @transform_0, window_bounds = array<i64: 8, 32>}, {pipeline_mode = #tpu.pipeline_mode<synchronous>, transform_indices = @transform_1, window_bounds = array<i64: 32, 128>}, {pipeline_mode = #tpu.pipeline_mode<synchronous>, transform_indices = @transform_2, window_bounds = array<i64: 1, 128>}, {pipeline_mode = #tpu.pipeline_mode<synchronous>, transform_indices = @transform_3, window_bounds = array<i64: 8, 128>}, {pipeline_mode = #tpu.pipeline_mode<synchronous>, transform_indices = @transform_4, window_bounds = array<i64: 8, 1>}, {transform_indices = @transform_5, window_bounds = array<i64: 8, 8>}]} {
    %c0 = arith.constant 0 : index
    %c0_0 = arith.constant 0 : index
    %0 = vector.load %arg1[%c0, %c0_0] : memref<8x32xf32, #tpu.memory_space<vmem>>, vector<8x32xf32>
    %c0_1 = arith.constant 0 : index
    %c0_2 = arith.constant 0 : index
    %1 = vector.load %arg2[%c0_1, %c0_2] : memref<32x128xf32, #tpu.memory_space<vmem>>, vector<32x128xf32>
    %cst = arith.constant dense<0.000000e+00> : vector<8x128xf32>
    %2 = tpu.matmul %0, %1, %cst {dimension_numbers = #tpu.dot_dimension_numbers<[1], [0], [0], [1], [0, 0, 1, 1], [], []>} : vector<8x32xf32>, vector<32x128xf32>, vector<8x128xf32> -> vector<8x128xf32>
    %c0_3 = arith.constant 0 : index
    %c0_4 = arith.constant 0 : index
    %3 = vector.load %arg3[%c0_3, %c0_4] : memref<1x128xf32, #tpu.memory_space<vmem>>, vector<1x128xf32>
    %4 = vector.broadcast %3 : vector<1x128xf32> to vector<8x128xf32>
    %5 = arith.addf %2, %4 : vector<8x128xf32>
    %cst_5 = arith.constant 0.000000e+00 : f32
    %6 = vector.broadcast %cst_5 : f32 to vector<8x128xf32>
    %7 = arith.maximumf %5, %6 : vector<8x128xf32>
    %c0_6 = arith.constant 0 : index
    %c0_7 = arith.constant 0 : index
    %8 = vector.load %arg4[%c0_6, %c0_7] : memref<8x128xf32, #tpu.memory_space<vmem>>, vector<8x128xf32>
    %cst_8 = arith.constant dense<0.000000e+00> : vector<8x8xf32>
    %9 = tpu.matmul %8, %7, %cst_8 {dimension_numbers = #tpu.dot_dimension_numbers<[1], [1], [0], [0], [0, 0, 1, 0], [], []>} : vector<8x128xf32>, vector<8x128xf32>, vector<8x8xf32> -> vector<8x8xf32>
    %c0_9 = arith.constant 0 : index
    %c0_10 = arith.constant 0 : index
    %10 = vector.load %arg5[%c0_9, %c0_10] : memref<8x1xf32, #tpu.memory_space<vmem>>, vector<8x1xf32>
    %11 = vector.broadcast %10 : vector<8x1xf32> to vector<8x8xf32>
    %12 = arith.addf %9, %11 : vector<8x8xf32>
    %c0_11 = arith.constant 0 : index
    %c0_12 = arith.constant 0 : index
    %13 = vector.load %arg6[%c0_11, %c0_12] : memref<8x8xf32, #tpu.memory_space<vmem>>, vector<8x8xf32>
    tpu.vector_store %arg6[%c0_11, %c0_12], %12 {strides = array<i32>} : memref<8x8xf32, #tpu.memory_space<vmem>>, vector<8x8xf32>,
    return
  }
  func.func @transform_0(%arg0: i32) -> (i32, i32) {
    %c0_i32 = arith.constant 0 : i32
    %c0_i32_0 = arith.constant 0 : i32
    return %arg0, %c0_i32 : i32, i32
  }
  func.func @transform_1(%arg0: i32) -> (i32, i32) {
    %c0_i32 = arith.constant 0 : i32
    %c0_i32_0 = arith.constant 0 : i32
    %c0_i32_1 = arith.constant 0 : i32
    return %c0_i32, %c0_i32_0 : i32, i32
  }
  func.func @transform_2(%arg0: i32) -> (i32, i32) {
    %c0_i32 = arith.constant 0 : i32
    %c0_i32_0 = arith.constant 0 : i32
    %c0_i32_1 = arith.constant 0 : i32
    return %c0_i32, %c0_i32_0 : i32, i32
  }
  func.func @transform_3(%arg0: i32) -> (i32, i32) {
    %c0_i32 = arith.constant 0 : i32
    %c0_i32_0 = arith.constant 0 : i32
    %c0_i32_1 = arith.constant 0 : i32
    return %c0_i32, %c0_i32_0 : i32, i32
  }
  func.func @transform_4(%arg0: i32) -> (i32, i32) {
    %c0_i32 = arith.constant 0 : i32
    %c0_i32_0 = arith.constant 0 : i32
    %c0_i32_1 = arith.constant 0 : i32
    return %c0_i32, %c0_i32_0 : i32, i32
  }
  func.func @transform_5(%arg0: i32) -> (i32, i32) {
    %c0_i32 = arith.constant 0 : i32
    %c0_i32_0 = arith.constant 0 : i32
    return %c0_i32, %arg0 : i32, i32
  }
}

</mosaic_0001>

<llo_original>
// kernel: multi_class_forward.1
$region0: #{multi_class_forward.1}
  #allocation0 [shape = 'u32[]', space=smem, size = 0x4, offset = 0x4, fixed_abs, tag = 'smem constant byte address 0x4 - core index']
  #allocation1 [shape = 'u32[144,128]{1,0:T(1,128)}', space=vmem, size = 0x12000, scoped, tag = 'internal scratch']
  %s0 = inlined_call_operand.vmem [shape: f32[8,32], index: 0, kind: input, shape index: {}]
  %s1 = inlined_call_operand.vmem [shape: f32[32,128], index: 1, kind: input, shape index: {}]
  %s2 = inlined_call_operand.vmem [shape: f32[1,128], index: 2, kind: input, shape index: {}]
  %s3 = inlined_call_operand.vmem [shape: f32[8,128], index: 3, kind: input, shape index: {}]
  %s4 = inlined_call_operand.vmem [shape: f32[8,1], index: 4, kind: input, shape index: {}]
  %s5 = inlined_call_operand.vmem [shape: f32[8,8], index: 5, kind: output, shape index: {}]
  %s6 = sld [smem:[#allocation0]]
  $region30: #{multi_class_forward.1} parent=0
    _
  %s8 = ssub.s32 1, %s6
  %s9 = scalar_select 0, %s8, %s6
  // Predicated region
  $region2: #{multi_class_forward.1} parent=0 // pred_check
    _
  $region3: #{multi_class_forward.1} parent=0 // pred_check_branch
    %11 = sbr.rel (0) target = $region5
  $region4: #{multi_class_forward.1} parent=0 // pred_region
    _
  $region5: #{multi_class_forward.1} parent=0 // pred_fallthru
    _
  // Predicated region
  $region6: #{multi_class_forward.1} parent=0 // pred_check
    _
  $region7: #{multi_class_forward.1} parent=0 // pred_check_branch
    %13 = sbr.rel (0) target = $region9
  $region8: #{multi_class_forward.1} parent=0 // pred_region
    _
  $region9: #{multi_class_forward.1} parent=0 // pred_fallthru
    _
  // Predicated region
  $region10: #{multi_class_forward.1} parent=0 // pred_check
    _
  $region11: #{multi_class_forward.1} parent=0 // pred_check_branch
    %15 = sbr.rel (0) target = $region13
  $region12: #{multi_class_forward.1} parent=0 // pred_region
    _
  $region13: #{multi_class_forward.1} parent=0 // pred_fallthru
    _
  // Predicated region
  $region14: #{multi_class_forward.1} parent=0 // pred_check
    _
  $region15: #{multi_class_forward.1} parent=0 // pred_check_branch
    %17 = sbr.rel (0) target = $region17
  $region16: #{multi_class_forward.1} parent=0 // pred_region
    _
  $region17: #{multi_class_forward.1} parent=0 // pred_fallthru
    _
  // Predicated region
  $region18: #{multi_class_forward.1} parent=0 // pred_check
    _
  $region19: #{multi_class_forward.1} parent=0 // pred_check_branch
    %19 = sbr.rel (0) target = $region21
  $region20: #{multi_class_forward.1} parent=0 // pred_region
    _
  $region21: #{multi_class_forward.1} parent=0 // pred_fallthru
    _
  %v20 = vld [vmem:[%s0] sm:$0xff]
  %v21 = vld [vmem:[%s1] sm:$0xff]
  %v22 = vld [vmem:[%s1 + $0x8] sm:$0xff]
  %v23 = vld [vmem:[%s1 + $0x10] sm:$0xff]
  %v24 = vld [vmem:[%s1 + $0x18] sm:$0xff]
  %v25 = vld [vmem:[%s2] sm:$0x1]
  %v27 = vlaneseq
  %v28 = vshrl.u32 %v27, 7
  %v29 = vsub.s32 0, %v28
  %v30 = vrot.slane %v25, %v29
  %vm32 = vcmask 261120
  %v34 = vsel %vm32, %v20, 0
  %36 = vmatprep.subr.mxu0 0.0
  %37 = vmatpush1.msra.mxu0 0.0
  %38 = vmatprep.subr.mxu0 0.0
  %39 = vmatpush1.msra.mxu0 0.0
  %40 = vmatprep.subr.mxu0 0.0
  %41 = vmatpush1.msra.mxu0 0.0
  %42 = vmatprep.subr.mxu0 0.0
  %43 = vmatpush1.msra.mxu0 0.0
  %44 = vmatprep.subr.mxu0 0.0
  %45 = vmatpush1.msra.mxu0 0.0
  %46 = vmatprep.subr.mxu0 0.0
  %47 = vmatpush1.msra.mxu0 0.0
  %48 = vmatprep.subr.mxu0 0.0
  %49 = vmatpush1.msra.mxu0 0.0
  %50 = vmatprep.subr.mxu0 0.0
  %51 = vmatpush1.msra.mxu0 0.0
  %52 = vmatprep.subr.mxu0 0.0
  %53 = vmatpush1.msra.mxu0 0.0
  %54 = vmatprep.subr.mxu0 0.0
  %55 = vmatpush1.msra.mxu0 0.0
  %56 = vmatprep.subr.mxu0 0.0
  %57 = vmatpush1.msra.mxu0 0.0
  %58 = vmatprep.subr.mxu0 0.0
  %59 = vmatpush1.msra.mxu0 0.0
  %60 = vmatprep.subr.mxu0 0.0
  %61 = vmatpush1.msra.mxu0 %v24
  %62 = vmatprep.subr.mxu0 0.0
  %63 = vmatpush1.msra.mxu0 %v23
  %64 = vmatprep.subr.mxu0 0.0
  %65 = vmatpush1.msra.mxu0 %v22
  %66 = vmatprep.subr.mxu0 0.0
  %67 = vmatpush1.msra.mxu0 %v21
  %68 = vmatprep.subr.mxu0 0.0
  %69 = vmatpush2.msra.mxu0 0.0
  %70 = vmatprep.subr.mxu0 0.0
  %71 = vmatpush2.msra.mxu0 0.0
  %72 = vmatprep.subr.mxu0 0.0
  %73 = vmatpush2.msra.mxu0 0.0
  %74 = vmatprep.subr.mxu0 0.0
  %75 = vmatpush2.msra.mxu0 0.0
  %76 = vmatprep.subr.mxu0 0.0
  %77 = vmatpush2.msra.mxu0 0.0
  %78 = vmatprep.subr.mxu0 0.0
  %79 = vmatpush2.msra.mxu0 0.0
  %80 = vmatprep.subr.mxu0 0.0
  %81 = vmatpush2.msra.mxu0 0.0
  %82 = vmatprep.subr.mxu0 0.0
  %83 = vmatpush2.msra.mxu0 0.0
  %84 = vmatprep.subr.mxu0 0.0
  %85 = vmatpush2.msra.mxu0 0.0
  %86 = vmatprep.subr.mxu0 0.0
  %87 = vmatpush2.msra.mxu0 0.0
  %88 = vmatprep.subr.mxu0 0.0
  %89 = vmatpush2.msra.mxu0 0.0
  %90 = vmatprep.subr.mxu0 0.0
  %91 = vmatpush2.msra.mxu0 0.0
  %92 = vmatprep.subr.mxu0 0.0
  %93 = vmatpush2.msra.mxu0 0.0
  %94 = vmatprep.subr.mxu0 0.0
  %95 = vmatpush2.msra.mxu0 0.0
  %96 = vmatprep.subr.mxu0 0.0
  %97 = vmatpush2.msra.mxu0 0.0
  %98 = vmatprep.subr.mxu0 0.0
  %99 = vmatpush2.msra.mxu0 0.0
  %100 = vmatprep.mubr.f32.mxu0 0.0
  %101 = vmatmul.mubr.f32.gmra.mxu0 %v34
  %v102 = vpop.f32.mrf.mxu0
  %v103 = vadd.f32 %v30, %v102
  %v104 = vpop.f32.mrf.mxu0
  %105 = vdwg.mxu0
  %v106 = vmax.f32 %v103, 0.0
  %v107 = vld [vmem:[%s3] sm:$0xff]
  %v108 = vld [vmem:[%s4] sm:$0xff]
  %110 = vset.pattern.permute.xlu0 0
  %111 = vperm.xlu0 %110, %v108
  %v112 = vpop.permute.xlu0 %111
  %114 = vmatprep.subr.mxu0 0.0
  %115 = vmatpush1.xpose.msra.mxu0 0.0
  %116 = vmatprep.subr.mxu0 0.0
  %117 = vmatpush1.xpose.msra.mxu0 0.0
  %118 = vmatprep.subr.mxu0 0.0
  %119 = vmatpush1.xpose.msra.mxu0 0.0
  %120 = vmatprep.subr.mxu0 0.0
  %121 = vmatpush1.xpose.msra.mxu0 0.0
  %122 = vmatprep.subr.mxu0 0.0
  %123 = vmatpush1.xpose.msra.mxu0 0.0
  %124 = vmatprep.subr.mxu0 0.0
  %125 = vmatpush1.xpose.msra.mxu0 0.0
  %126 = vmatprep.subr.mxu0 0.0
  %127 = vmatpush1.xpose.msra.mxu0 0.0
  %128 = vmatprep.subr.mxu0 0.0
  %129 = vmatpush1.xpose.msra.mxu0 0.0
  %130 = vmatprep.subr.mxu0 0.0
  %131 = vmatpush1.xpose.msra.mxu0 0.0
  %132 = vmatprep.subr.mxu0 0.0
  %133 = vmatpush1.xpose.msra.mxu0 0.0
  %134 = vmatprep.subr.mxu0 0.0
  %135 = vmatpush1.xpose.msra.mxu0 0.0
  %136 = vmatprep.subr.mxu0 0.0
  %137 = vmatpush1.xpose.msra.mxu0 0.0
  %138 = vmatprep.subr.mxu0 0.0
  %139 = vmatpush1.xpose.msra.mxu0 0.0
  %140 = vmatprep.subr.mxu0 0.0
  %141 = vmatpush1.xpose.msra.mxu0 0.0
  %142 = vmatprep.subr.mxu0 0.0
  %143 = vmatpush1.xpose.msra.mxu0 0.0
  %144 = vmatprep.subr.mxu0 0.0
  %145 = vmatpush1.xpose.msra.mxu0 %v106
  %146 = vmatprep.subr.mxu0 0.0
  %147 = vmatpush2.xpose.msra.mxu0 0.0
  %148 = vmatprep.subr.mxu0 0.0
  %149 = vmatpush2.xpose.msra.mxu0 0.0
  %150 = vmatprep.subr.mxu0 0.0
  %151 = vmatpush2.xpose.msra.mxu0 0.0
  %152 = vmatprep.subr.mxu0 0.0
  %153 = vmatpush2.xpose.msra.mxu0 0.0
  %154 = vmatprep.subr.mxu0 0.0
  %155 = vmatpush2.xpose.msra.mxu0 0.0
  %156 = vmatprep.subr.mxu0 0.0
  %157 = vmatpush2.xpose.msra.mxu0 0.0
  %158 = vmatprep.subr.mxu0 0.0
  %159 = vmatpush2.xpose.msra.mxu0 0.0
  %160 = vmatprep.subr.mxu0 0.0
  %161 = vmatpush2.xpose.msra.mxu0 0.0
  %162 = vmatprep.subr.mxu0 0.0
  %163 = vmatpush2.xpose.msra.mxu0 0.0
  %164 = vmatprep.subr.mxu0 0.0
  %165 = vmatpush2.xpose.msra.mxu0 0.0
  %166 = vmatprep.subr.mxu0 0.0
  %167 = vmatpush2.xpose.msra.mxu0 0.0
  %168 = vmatprep.subr.mxu0 0.0
  %169 = vmatpush2.xpose.msra.mxu0 0.0
  %170 = vmatprep.subr.mxu0 0.0
  %171 = vmatpush2.xpose.msra.mxu0 0.0
  %172 = vmatprep.subr.mxu0 0.0
  %173 = vmatpush2.xpose.msra.mxu0 0.0
  %174 = vmatprep.subr.mxu0 0.0
  %175 = vmatpush2.xpose.msra.mxu0 0.0
  %176 = vmatprep.subr.mxu0 0.0
  %177 = vmatpush2.xpose.msra.mxu0 0.0
  %178 = vmatprep.mubr.f32.mxu0 0.0
  %179 = vmatmul.mubr.f32.gmra.mxu0 %v107
  %v180 = vpop.f32.mrf.mxu0
  %v181 = vadd.f32 %v112, %v180
  %v182 = vpop.f32.mrf.mxu0
  %183 = vdwg.mxu0
  %vm184 = vcmask 64512
  %185 = vst.msk [vmem:[%s5] sm:$0xff] %vm184, %v181
  // Predicated region
  $region22: #{multi_class_forward.1} parent=0 // pred_check
    _
  $region23: #{multi_class_forward.1} parent=0 // pred_check_branch
    %187 = sbr.rel (0) target = $region25
  $region24: #{multi_class_forward.1} parent=0 // pred_region
    _
  $region25: #{multi_class_forward.1} parent=0 // pred_fallthru
    _
  // Predicated region
  $region26: #{multi_class_forward.1} parent=0 // pred_check
    _
  $region27: #{multi_class_forward.1} parent=0 // pred_check_branch
    %189 = sbr.rel (0) target = $region29
  $region28: #{multi_class_forward.1} parent=0 // pred_region
    _
  $region29: #{multi_class_forward.1} parent=0 // pred_fallthru
    _

</llo_original>
